<compile_context>
chip_gen: v7x
topology: tpu7x:2x2x1
jax: 0.10.0
libtpu: 0.0.40
codegen_flags: <defaults>
</compile_context>

<pallas_src>
import math

import jax
import jax.numpy as jnp
from jax.experimental import pallas as pl
from jax.experimental.pallas import tpu as pltpu

TWO_PI = 2.0 * math.pi


def _gfp_kernel(x_ref, w_ref, o_ref):
    # x_ref: (tm, g) f32        -- g consecutive time steps per stored super-row
    # w_ref: (1, half) f32      -- raw frequencies (2*pi applied here, in-kernel)
    # o_ref: (tm, g * 2*half)   -- lane-dense output tile
    g = x_ref.shape[-1]
    half = w_ref.shape[-1]
    w = w_ref[...]                                        # (1, half)

    if g == 1 and half % 128 == 0:
        # Both halves lane-aligned: skip the concatenate, two direct stores.
        x_proj = x_ref[...] * w * TWO_PI                  # (tm, half), ref order
        o_ref[:, :half] = jnp.sin(x_proj).astype(o_ref.dtype)
        o_ref[:, half:] = jnp.cos(x_proj).astype(o_ref.dtype)
    else:
        # Build the full-width row in registers, then one unmasked store.
        pieces = []
        for j in range(g):                                # static unroll, g small
            x_proj = x_ref[:, j:j + 1] * w * TWO_PI       # (tm, half), ref order
            pieces.append(jnp.sin(x_proj))
            pieces.append(jnp.cos(x_proj))
        o_ref[...] = jnp.concatenate(pieces, axis=-1).astype(o_ref.dtype)


def _choose_group(batch, embed_dim, max_group=16):
    """Rows packed per stored super-row so the stored width is a multiple of 128."""
    if embed_dim % 128 == 0:
        return 1
    g = 128 // math.gcd(embed_dim, 128)
    if g <= max_group and batch % g == 0:
        return g
    return 1  # fall back to the plain (masked-store) layout


def gaussian_fourier_projection(x, W, *, out_dtype=jnp.float32,
                                target_tile_bytes=2 << 20):
    """x: (B,) float, W: (embed_dim//2,) float -> (B, embed_dim) out_dtype."""
    B = int(x.shape[0])
    half = int(W.shape[0])
    embed_dim = 2 * half

    g = _choose_group(B, embed_dim)
    Bg = B // g
    stored_width = g * embed_dim
    out_bytes = jnp.dtype(out_dtype).itemsize

    # Byte-targeted row tile (multiple of 8, or the full extent for small B).
    row_bytes = stored_width * out_bytes
    tm = max(8, target_tile_bytes // row_bytes)
    tm = max(8, (int(tm) // 8) * 8)
    if tm >= Bg:
        tm = Bg

    x2d = x.astype(jnp.float32).reshape(Bg, g)
    w2d = W.astype(jnp.float32).reshape(1, half)          # untouched; 2*pi in-kernel

    cost = pl.CostEstimate(
        flops=2 * B * half,                               # two muls per element
        transcendentals=B * embed_dim,                    # one sin + one cos per pair
        bytes_accessed=B * embed_dim * out_bytes + B * 4 + half * 4,
    )

    out = pl.pallas_call(
        _gfp_kernel,
        out_shape=jax.ShapeDtypeStruct((Bg, stored_width), out_dtype),
        grid=(pl.cdiv(Bg, tm),),
        in_specs=[
            pl.BlockSpec((tm, g), lambda i: (i, 0)),      # row tile of grouped x
            pl.BlockSpec((1, half), lambda i: (0, 0)),    # full W, reused every step
        ],
        out_specs=pl.BlockSpec((tm, stored_width), lambda i: (i, 0)),
        compiler_params=pltpu.CompilerParams(
            dimension_semantics=("parallel",),            # 2-TC split on v7x
        ),
        cost_estimate=cost,
    )(x2d, w2d)

    # Same row-major bytes as (B, embed_dim): the reshape is free metadata.
    return out.reshape(B, embed_dim)


if __name__ == "__main__":
    key = jax.random.PRNGKey(0)
    k_w, k_x = jax.random.split(key)

    embed_dim = 32          # output embedding dimension
    scale = 30.0
    batch = 8               # number of time steps

    # Fixed "parameter": W ~ N(0, 1) * scale, shape (embed_dim // 2,)
    W = jax.random.normal(k_w, (embed_dim // 2,), dtype=jnp.float32) * scale
    # Input time steps, shape (B,)
    x = jax.random.uniform(k_x, (batch,), dtype=jnp.float32)

    out = gaussian_fourier_projection(x, W)
    out = jax.block_until_ready(out)

    # Reference in plain JAX (matches the PyTorch forward semantics & op order).
    x_proj = x[:, None] * W[None, :] * (2.0 * math.pi)
    ref = jnp.concatenate([jnp.sin(x_proj), jnp.cos(x_proj)], axis=-1)

    assert out.shape == (batch, embed_dim)
    # sin/cos of large arguments (|x*W*2pi| up to a few hundred) amplify f32
    # argument/range-reduction differences between implementations to ~1e-5;
    # 2e-4 is comfortably above that and far below any real bug (O(1) errors).
    assert jnp.allclose(out, ref, atol=2e-4, rtol=2e-4), float(
        jnp.max(jnp.abs(out - ref)))

    print("KERNEL_OK")
</pallas_src>

<mosaic_0001>
module attributes {stable_mosaic.version = 11 : i64} {
  func.func @_gfp_kernel(%arg0: i32, %arg1: memref<2x4xf32, #tpu.memory_space<vmem>>, %arg2: memref<1x16xf32, #tpu.memory_space<vmem>>, %arg3: memref<2x128xf32, #tpu.memory_space<vmem>>) attributes {dimension_semantics = [#tpu.dimension_semantics<parallel>], iteration_bounds = array<i64: 1>, scalar_prefetch = 0 : i64, scratch_operands = 0 : i64, tpu.core_type = #tpu.core_type<tc>, window_params = [{transform_indices = @transform_0, window_bounds = array<i64: 2, 4>}, {pipeline_mode = #tpu.pipeline_mode<synchronous>, transform_indices = @transform_1, window_bounds = array<i64: 1, 16>}, {transform_indices = @transform_2, window_bounds = array<i64: 2, 128>}]} {
    %c0 = arith.constant 0 : index
    %c0_0 = arith.constant 0 : index
    %0 = vector.load %arg2[%c0, %c0_0] : memref<1x16xf32, #tpu.memory_space<vmem>>, vector<1x16xf32>
    %c0_1 = arith.constant 0 : index
    %c0_2 = arith.constant 0 : index
    %1 = vector.load %arg1[%c0_1, %c0_2] : memref<2x4xf32, #tpu.memory_space<vmem>>, vector<2x1xf32>
    %2 = vector.broadcast %1 : vector<2x1xf32> to vector<2x16xf32>
    %3 = vector.broadcast %0 : vector<1x16xf32> to vector<2x16xf32>
    %4 = arith.mulf %2, %3 : vector<2x16xf32>
    %cst = arith.constant 6.28318548 : f32
    %5 = vector.broadcast %cst : f32 to vector<2x16xf32>
    %6 = arith.mulf %4, %5 : vector<2x16xf32>
    %7 = math.sin %6 : vector<2x16xf32>
    %8 = math.cos %6 : vector<2x16xf32>
    %c0_3 = arith.constant 0 : index
    %c1 = arith.constant 1 : index
    %9 = vector.load %arg1[%c0_3, %c1] : memref<2x4xf32, #tpu.memory_space<vmem>>, vector<2x1xf32>
    %10 = vector.broadcast %9 : vector<2x1xf32> to vector<2x16xf32>
    %11 = vector.broadcast %0 : vector<1x16xf32> to vector<2x16xf32>
    %12 = arith.mulf %10, %11 : vector<2x16xf32>
    %cst_4 = arith.constant 6.28318548 : f32
    %13 = vector.broadcast %cst_4 : f32 to vector<2x16xf32>
    %14 = arith.mulf %12, %13 : vector<2x16xf32>
    %15 = math.sin %14 : vector<2x16xf32>
    %16 = math.cos %14 : vector<2x16xf32>
    %c0_5 = arith.constant 0 : index
    %c2 = arith.constant 2 : index
    %17 = vector.load %arg1[%c0_5, %c2] : memref<2x4xf32, #tpu.memory_space<vmem>>, vector<2x1xf32>
    %18 = vector.broadcast %17 : vector<2x1xf32> to vector<2x16xf32>
    %19 = vector.broadcast %0 : vector<1x16xf32> to vector<2x16xf32>
    %20 = arith.mulf %18, %19 : vector<2x16xf32>
    %cst_6 = arith.constant 6.28318548 : f32
    %21 = vector.broadcast %cst_6 : f32 to vector<2x16xf32>
    %22 = arith.mulf %20, %21 : vector<2x16xf32>
    %23 = math.sin %22 : vector<2x16xf32>
    %24 = math.cos %22 : vector<2x16xf32>
    %c0_7 = arith.constant 0 : index
    %c3 = arith.constant 3 : index
    %25 = vector.load %arg1[%c0_7, %c3] : memref<2x4xf32, #tpu.memory_space<vmem>>, vector<2x1xf32>
    %26 = vector.broadcast %25 : vector<2x1xf32> to vector<2x16xf32>
    %27 = vector.broadcast %0 : vector<1x16xf32> to vector<2x16xf32>
    %28 = arith.mulf %26, %27 : vector<2x16xf32>
    %cst_8 = arith.constant 6.28318548 : f32
    %29 = vector.broadcast %cst_8 : f32 to vector<2x16xf32>
    %30 = arith.mulf %28, %29 : vector<2x16xf32>
    %31 = math.sin %30 : vector<2x16xf32>
    %32 = math.cos %30 : vector<2x16xf32>
    %33 = tpu.concatenate %7, %8, %15, %16, %23, %24, %31, %32 in 1 : vector<2x16xf32>, vector<2x16xf32>, vector<2x16xf32>, vector<2x16xf32>, vector<2x16xf32>, vector<2x16xf32>, vector<2x16xf32>, vector<2x16xf32> -> vector<2x128xf32>
    %c0_9 = arith.constant 0 : index
    %c0_10 = arith.constant 0 : index
    %34 = vector.load %arg3[%c0_9, %c0_10] : memref<2x128xf32, #tpu.memory_space<vmem>>, vector<2x128xf32>
    tpu.vector_store %arg3[%c0_9, %c0_10], %33 {strides = array<i32>} : memref<2x128xf32, #tpu.memory_space<vmem>>, vector<2x128xf32>,
    return
  }
  func.func @transform_0(%arg0: i32) -> (i32, i32) {
    %c0_i32 = arith.constant 0 : i32
    %c0_i32_0 = arith.constant 0 : i32
    return %arg0, %c0_i32 : i32, i32
  }
  func.func @transform_1(%arg0: i32) -> (i32, i32) {
    %c0_i32 = arith.constant 0 : i32
    %c0_i32_0 = arith.constant 0 : i32
    %c0_i32_1 = arith.constant 0 : i32
    return %c0_i32, %c0_i32_0 : i32, i32
  }
  func.func @transform_2(%arg0: i32) -> (i32, i32) {
    %c0_i32 = arith.constant 0 : i32
    %c0_i32_0 = arith.constant 0 : i32
    return %arg0, %c0_i32 : i32, i32
  }
}

</mosaic_0001>

<llo_original>
// kernel: tpu_custom_call.1
$region0: #{tpu_custom_call.1}
  #allocation0 [shape = 'u32[]', space=smem, size = 0x4, offset = 0x4, fixed_abs, tag = 'smem constant byte address 0x4 - core index']
  #allocation1 [shape = 'u32[144,128]{1,0:T(1,128)}', space=vmem, size = 0x12000, scoped, tag = 'internal scratch']
  %s0 = inlined_call_operand.hbm [shape: f32[2,4], index: 0, kind: input, shape index: {}]
  %s1 = inlined_call_operand.vmem [shape: f32[1,16], index: 1, kind: input, shape index: {}]
  %s2 = inlined_call_operand.hbm [shape: f32[2,128], index: 2, kind: output, shape index: {}]
  %s3 = sld [smem:[#allocation0]]
  $region22: #{tpu_custom_call.1} parent=0
    _
  %s5 = ssub.s32 1, %s3
  %s6 = scalar_select 0, %s5, %s3
  $region1: #{tpu_custom_call.1} parent=0
    #allocation2 [shape = 'u8[1024]{0}', space=vmem, size = 0x400, scoped, tag = 'input window, operand 0, single buffered']
    #allocation3 [shape = 's32[1]{0}', space=sflag, size = 0x4, scoped, tag = 'scoped memory for tpu_custom_call.1']
    #allocation4 [shape = 's32[1]{0}', space=sflag, size = 0x4, scoped, tag = 'scoped memory for tpu_custom_call.1']
    #allocation5 [shape = 'u8[1024]{0}', space=vmem, size = 0x400, scoped, tag = 'output window, operand 0, single buffered']
    %7 = vsyncpa [#allocation3], 0
    %8 = vsyncpa [#allocation4], 0
    // Predicated region
    $region2: #{tpu_custom_call.1} parent=1 // pred_check
      _
    $region3: #{tpu_custom_call.1} parent=1 // pred_check_branch
      %10 = sbr.rel (0) target = $region5
    $region4: #{tpu_custom_call.1} parent=1 // pred_region
      %s12 = ssub.s32 32, 32
      %13 = vsyncadd [#allocation3], %s12
      %s15 = sshll.u32 [#allocation2], 4
      %s16 = int_to_ptr.vmem [resolvable:$true] %s15
      %18 = dma.hbm_to_vmem [thread:$0]  %s0, 32, %s16, [#allocation3]
    $region5: #{tpu_custom_call.1} parent=1 // pred_fallthru
      _
    // Predicated region
    $region6: #{tpu_custom_call.1} parent=1 // pred_check
      _
    $region7: #{tpu_custom_call.1} parent=1 // pred_check_branch
      %20 = sbr.rel (0) target = $region9
    $region8: #{tpu_custom_call.1} parent=1 // pred_region
      _
    $region9: #{tpu_custom_call.1} parent=1 // pred_fallthru
      _
    // Predicated region
    $region10: #{tpu_custom_call.1} parent=1 // pred_check
      _
    $region11: #{tpu_custom_call.1} parent=1 // pred_check_branch
      %22 = sbr.rel (0) target = $region13
    $region12: #{tpu_custom_call.1} parent=1 // pred_region
      %23 = dma.done [#allocation3], 32
    $region13: #{tpu_custom_call.1} parent=1 // pred_fallthru
      _
    %v24 = vld [vmem:[%s1] sm:$0x1]
    %v25 = vld [vmem:[#allocation2] sm:$0x3]
    %27 = vset.pattern.permute.xlu0 0
    %28 = vperm.xlu0 %27, %v25
    %v29 = vpop.permute.xlu0 %28
    %v32 = vlaneseq
    %v33 = vshrl.u32 %v32, 7
    %v34 = vsub.s32 0, %v33
    %v35 = vrot.slane %v24, %v34
    %v37 = vmul.f32 %v29, %v35
    %v38 = vmul.f32 %v37, 6.2831855
    %v39 = vand.u32 2147483647, %v38
    %vm40 = vcmp.le.f32.partialorder %v39, 0.7853982
    %vm41 = vcmp.lt.s32.totalorder %v38, 0
    %v42 = vand.u32 %v38, 2139095040
    %v43 = vshrl.u32 %v42, 23
    %v44 = vsub.s32 %v43, 127
    %v45 = vand.u32 2147483647, %v38
    %v46 = vand.u32 %v45, 8388607
    %v47 = vor.u32 %v46, 8388608
    %v48 = vsub.s32 0, %v47
    %v49 = vadd.s32 %v44, 1
    %vm50 = vcmp.gt.s32.totalorder %v49, 0
    %v51 = vsel %vm50, %v49, 0
    %v52 = vshrl.u32 %v51, 5
    %v53 = vand.u32 %v51, 31
    %v54 = vsub.s32 32, %v53
    %v55 = vshrl.u32 683565275, %v54
    %v56 = vshll.u32 683565275, %v53
    %v57 = vshrl.u32 2475754826, %v54
    %v58 = vor.u32 %v56, %v57
    %v59 = vshll.u32 2475754826, %v53
    %v60 = vshrl.u32 2131351028, %v54
    %v61 = vor.u32 %v59, %v60
    %v62 = vshll.u32 2131351028, %v53
    %v63 = vshrl.u32 2102212464, %v54
    %v64 = vor.u32 %v62, %v63
    %v65 = vshll.u32 2102212464, %v53
    %v66 = vshrl.u32 920167782, %v54
    %v67 = vor.u32 %v65, %v66
    %v68 = vshll.u32 920167782, %v53
    %v69 = vshrl.u32 1326507024, %v54
    %v70 = vor.u32 %v68, %v69
    %vm71 = vcmp.lt.s32.totalorder %v52, 1
    %vm72 = vcmp.lt.s32.totalorder %v52, 2
    %vm73 = vcmp.lt.s32.totalorder %v52, 3
    %vm74 = vcmp.lt.s32.totalorder %v52, 4
    %v75 = vsel %vm71, %v55, %v58
    %v76 = vsel %vm74, %v64, 2102212464
    %v77 = vsel %vm73, %v61, %v76
    %v78 = vsel %vm72, %v75, %v77
    %v79 = vsel %vm71, %v58, %v61
    %v80 = vsel %vm74, %v67, 920167782
    %v81 = vsel %vm73, %v64, %v80
    %v82 = vsel %vm72, %v79, %v81
    %v83 = vsel %vm71, %v61, %v64
    %v84 = vsel %vm74, %v70, 1326507024
    %v85 = vsel %vm73, %v67, %v84
    %v86 = vsel %vm72, %v83, %v85
    %v87 = vshll.u32 %v47, 8
    %v88 = vmul.u32.u64.compose %v87, %v86
    %v89 = vextract.low.u32 %v88
    %v90 = vextract.high.u32 %v88
    %v91 = vmul.u32.u64.compose %v87, %v82
    %v92 = vextract.low.u32 %v91
    %v93 = vextract.high.u32 %v91
    %v94 = vmul.u32 %v87, %v78
    %v95 = vadd.s32 %v90, %v92
    %vm96 = vc.u32 %v90, %v92
    %v97 = vadd.s32 %v93, 1
    %v98 = vsel %vm96, %v97, %v93
    %v99 = vadd.s32 %v94, %v98
    %v100 = vadd.s32 %v99, 536870912
    %v101 = vshrl.u32 %v100, 30
    %v102 = vshll.u32 %v101, 30
    %v103 = vsub.s32 %v99, %v102
    %vm104 = vcmp.lt.s32.totalorder %v103, 0
    %v105 = vsub.s32 0, %v103
    %v106 = vsel %vm104, %v105, %v103
    %v107 = vclz %v106
    %v108 = vsub.s32 %v107, 2
    %vm109 = vcmp.gt.s32.totalorder 0, %v108
    %v110 = vsel %vm109, 0, %v108
    %v111 = vsub.s32 32, %v110
    %v112 = vshll.u32 %v103, %v110
    %v113 = vshrl.u32 %v95, %v111
    %v114 = vor.u32 %v112, %v113
    %v115 = vsub.s32 4294967266, %v110
    %v116 = vadd.s32 %v115, 127
    %v117 = vshll.u32 %v116, 23
    %v118 = vor.u32 4788187, %v117
    %v119 = vand.u32 2147483647, %v118
    %v121 = vcvt.s32.f32 %v114
    %v122 = vmul.f32 %v121, %v119
    %v123 = vxor.u32 %v122, 2147483648
    %v124 = vsel %vm41, %v123, %v122
    %v125 = vsub.s32 4, %v101
    %v126 = vsel %vm41, %v125, %v101
    %v127 = vsel %vm40, %v38, %v124
    %v128 = vsel %vm40, 0, %v126
    %v129 = vcosq.f32.pop %v127
    %v130 = vsinq.f32.pop %v127
    %vm131 = vweird.f32 %v38
    %v132 = vadd.s32 %v128, 3
    %v133 = vand.u32 %v132, 3
    %vm134 = vcmp.lt.s32.totalorder %v133, 2
    %vm135 = vcmp.eq.s32.totalorder %v133, 0
    %v136 = vxor.u32 %v130, 2147483648
    %v137 = vsel %vm135, %v129, %v136
    %vm138 = vcmp.eq.s32.totalorder %v133, 2
    %v139 = vxor.u32 %v129, 2147483648
    %v140 = vsel %vm138, %v139, %v130
    %v141 = vsel %vm134, %v137, %v140
    %v142 = vsel %vm131, nan, %v141
    %v143 = vand.u32 2147483647, %v38
    %vm144 = vcmp.le.f32.partialorder %v143, 0.7853982
    %vm145 = vcmp.lt.s32.totalorder %v38, 0
    %v146 = vand.u32 %v38, 2139095040
    %v147 = vshrl.u32 %v146, 23
    %v148 = vsub.s32 %v147, 127
    %v149 = vand.u32 2147483647, %v38
    %v150 = vand.u32 %v149, 8388607
    %v151 = vor.u32 %v150, 8388608
    %v152 = vsub.s32 0, %v151
    %v153 = vadd.s32 %v148, 1
    %vm154 = vcmp.gt.s32.totalorder %v153, 0
    %v155 = vsel %vm154, %v153, 0
    %v156 = vshrl.u32 %v155, 5
    %v157 = vand.u32 %v155, 31
    %v158 = vsub.s32 32, %v157
    %v159 = vshrl.u32 683565275, %v158
    %v160 = vshll.u32 683565275, %v157
    %v161 = vshrl.u32 2475754826, %v158
    %v162 = vor.u32 %v160, %v161
    %v163 = vshll.u32 2475754826, %v157
    %v164 = vshrl.u32 2131351028, %v158
    %v165 = vor.u32 %v163, %v164
    %v166 = vshll.u32 2131351028, %v157
    %v167 = vshrl.u32 2102212464, %v158
    %v168 = vor.u32 %v166, %v167
    %v169 = vshll.u32 2102212464, %v157
    %v170 = vshrl.u32 920167782, %v158
    %v171 = vor.u32 %v169, %v170
    %v172 = vshll.u32 920167782, %v157
    %v173 = vshrl.u32 1326507024, %v158
    %v174 = vor.u32 %v172, %v173
    %vm175 = vcmp.lt.s32.totalorder %v156, 1
    %vm176 = vcmp.lt.s32.totalorder %v156, 2
    %vm177 = vcmp.lt.s32.totalorder %v156, 3
    %vm178 = vcmp.lt.s32.totalorder %v156, 4
    %v179 = vsel %vm175, %v159, %v162
    %v180 = vsel %vm178, %v168, 2102212464
    %v181 = vsel %vm177, %v165, %v180
    %v182 = vsel %vm176, %v179, %v181
    %v183 = vsel %vm175, %v162, %v165
    %v184 = vsel %vm178, %v171, 920167782
    %v185 = vsel %vm177, %v168, %v184
    %v186 = vsel %vm176, %v183, %v185
    %v187 = vsel %vm175, %v165, %v168
    %v188 = vsel %vm178, %v174, 1326507024
    %v189 = vsel %vm177, %v171, %v188
    %v190 = vsel %vm176, %v187, %v189
    %v191 = vshll.u32 %v151, 8
    %v192 = vmul.u32.u64.compose %v191, %v190
    %v193 = vextract.low.u32 %v192
    %v194 = vextract.high.u32 %v192
    %v195 = vmul.u32.u64.compose %v191, %v186
    %v196 = vextract.low.u32 %v195
    %v197 = vextract.high.u32 %v195
    %v198 = vmul.u32 %v191, %v182
    %v199 = vadd.s32 %v194, %v196
    %vm200 = vc.u32 %v194, %v196
    %v201 = vadd.s32 %v197, 1
    %v202 = vsel %vm200, %v201, %v197
    %v203 = vadd.s32 %v198, %v202
    %v204 = vadd.s32 %v203, 536870912
    %v205 = vshrl.u32 %v204, 30
    %v206 = vshll.u32 %v205, 30
    %v207 = vsub.s32 %v203, %v206
    %vm208 = vcmp.lt.s32.totalorder %v207, 0
    %v209 = vsub.s32 0, %v207
    %v210 = vsel %vm208, %v209, %v207
    %v211 = vclz %v210
    %v212 = vsub.s32 %v211, 2
    %vm213 = vcmp.gt.s32.totalorder 0, %v212
    %v214 = vsel %vm213, 0, %v212
    %v215 = vsub.s32 32, %v214
    %v216 = vshll.u32 %v207, %v214
    %v217 = vshrl.u32 %v199, %v215
    %v218 = vor.u32 %v216, %v217
    %v219 = vsub.s32 4294967266, %v214
    %v220 = vadd.s32 %v219, 127
    %v221 = vshll.u32 %v220, 23
    %v222 = vor.u32 4788187, %v221
    %v223 = vand.u32 2147483647, %v222
    %v225 = vcvt.s32.f32 %v218
    %v226 = vmul.f32 %v225, %v223
    %v227 = vxor.u32 %v226, 2147483648
    %v228 = vsel %vm145, %v227, %v226
    %v229 = vsub.s32 4, %v205
    %v230 = vsel %vm145, %v229, %v205
    %v231 = vsel %vm144, %v38, %v228
    %v232 = vsel %vm144, 0, %v230
    %v233 = vcosq.f32.pop %v231
    %v234 = vsinq.f32.pop %v231
    %vm235 = vweird.f32 %v38
    %v236 = vand.u32 %v232, 3
    %vm237 = vcmp.lt.s32.totalorder %v236, 2
    %vm238 = vcmp.eq.s32.totalorder %v236, 0
    %v239 = vxor.u32 %v234, 2147483648
    %v240 = vsel %vm238, %v233, %v239
    %vm241 = vcmp.eq.s32.totalorder %v236, 2
    %v242 = vxor.u32 %v233, 2147483648
    %v243 = vsel %vm241, %v242, %v234
    %v244 = vsel %vm237, %v240, %v243
    %v245 = vsel %vm235, nan, %v244
    %246 = vset.pattern.permute.xlu0 1
    %247 = vperm.xlu0 %246, %v25
    %v248 = vpop.permute.xlu0 %247
    %v250 = vmul.f32 %v248, %v35
    %v251 = vmul.f32 %v250, 6.2831855
    %v252 = vand.u32 2147483647, %v251
    %vm253 = vcmp.le.f32.partialorder %v252, 0.7853982
    %vm254 = vcmp.lt.s32.totalorder %v251, 0
    %v255 = vand.u32 %v251, 2139095040
    %v256 = vshrl.u32 %v255, 23
    %v257 = vsub.s32 %v256, 127
    %v258 = vand.u32 2147483647, %v251
    %v259 = vand.u32 %v258, 8388607
    %v260 = vor.u32 %v259, 8388608
    %v261 = vsub.s32 0, %v260
    %v262 = vadd.s32 %v257, 1
    %vm263 = vcmp.gt.s32.totalorder %v262, 0
    %v264 = vsel %vm263, %v262, 0
    %v265 = vshrl.u32 %v264, 5
    %v266 = vand.u32 %v264, 31
    %v267 = vsub.s32 32, %v266
    %v268 = vshrl.u32 683565275, %v267
    %v269 = vshll.u32 683565275, %v266
    %v270 = vshrl.u32 2475754826, %v267
    %v271 = vor.u32 %v269, %v270
    %v272 = vshll.u32 2475754826, %v266
    %v273 = vshrl.u32 2131351028, %v267
    %v274 = vor.u32 %v272, %v273
    %v275 = vshll.u32 2131351028, %v266
    %v276 = vshrl.u32 2102212464, %v267
    %v277 = vor.u32 %v275, %v276
    %v278 = vshll.u32 2102212464, %v266
    %v279 = vshrl.u32 920167782, %v267
    %v280 = vor.u32 %v278, %v279
    %v281 = vshll.u32 920167782, %v266
    %v282 = vshrl.u32 1326507024, %v267
    %v283 = vor.u32 %v281, %v282
    %vm284 = vcmp.lt.s32.totalorder %v265, 1
    %vm285 = vcmp.lt.s32.totalorder %v265, 2
    %vm286 = vcmp.lt.s32.totalorder %v265, 3
    %vm287 = vcmp.lt.s32.totalorder %v265, 4
    %v288 = vsel %vm284, %v268, %v271
    %v289 = vsel %vm287, %v277, 2102212464
    %v290 = vsel %vm286, %v274, %v289
    %v291 = vsel %vm285, %v288, %v290
    %v292 = vsel %vm284, %v271, %v274
    %v293 = vsel %vm287, %v280, 920167782
    %v294 = vsel %vm286, %v277, %v293
    %v295 = vsel %vm285, %v292, %v294
    %v296 = vsel %vm284, %v274, %v277
    %v297 = vsel %vm287, %v283, 1326507024
    %v298 = vsel %vm286, %v280, %v297
    %v299 = vsel %vm285, %v296, %v298
    %v300 = vshll.u32 %v260, 8
    %v301 = vmul.u32.u64.compose %v300, %v299
    %v302 = vextract.low.u32 %v301
    %v303 = vextract.high.u32 %v301
    %v304 = vmul.u32.u64.compose %v300, %v295
    %v305 = vextract.low.u32 %v304
    %v306 = vextract.high.u32 %v304
    %v307 = vmul.u32 %v300, %v291
    %v308 = vadd.s32 %v303, %v305
    %vm309 = vc.u32 %v303, %v305
    %v310 = vadd.s32 %v306, 1
    %v311 = vsel %vm309, %v310, %v306
    %v312 = vadd.s32 %v307, %v311
    %v313 = vadd.s32 %v312, 536870912
    %v314 = vshrl.u32 %v313, 30
    %v315 = vshll.u32 %v314, 30
    %v316 = vsub.s32 %v312, %v315
    %vm317 = vcmp.lt.s32.totalorder %v316, 0
    %v318 = vsub.s32 0, %v316
    %v319 = vsel %vm317, %v318, %v316
    %v320 = vclz %v319
    %v321 = vsub.s32 %v320, 2
    %vm322 = vcmp.gt.s32.totalorder 0, %v321
    %v323 = vsel %vm322, 0, %v321
    %v324 = vsub.s32 32, %v323
    %v325 = vshll.u32 %v316, %v323
    %v326 = vshrl.u32 %v308, %v324
    %v327 = vor.u32 %v325, %v326
    %v328 = vsub.s32 4294967266, %v323
    %v329 = vadd.s32 %v328, 127
    %v330 = vshll.u32 %v329, 23
    %v331 = vor.u32 4788187, %v330
    %v332 = vand.u32 2147483647, %v331
    %v334 = vcvt.s32.f32 %v327
    %v335 = vmul.f32 %v334, %v332
    %v336 = vxor.u32 %v335, 2147483648
    %v337 = vsel %vm254, %v336, %v335
    %v338 = vsub.s32 4, %v314
    %v339 = vsel %vm254, %v338, %v314
    %v340 = vsel %vm253, %v251, %v337
    %v341 = vsel %vm253, 0, %v339
    %v342 = vcosq.f32.pop %v340
    %v343 = vsinq.f32.pop %v340
    %vm344 = vweird.f32 %v251
    %v345 = vadd.s32 %v341, 3
    %v346 = vand.u32 %v345, 3
    %vm347 = vcmp.lt.s32.totalorder %v346, 2
    %vm348 = vcmp.eq.s32.totalorder %v346, 0
    %v349 = vxor.u32 %v343, 2147483648
    %v350 = vsel %vm348, %v342, %v349
    %vm351 = vcmp.eq.s32.totalorder %v346, 2
    %v352 = vxor.u32 %v342, 2147483648
    %v353 = vsel %vm351, %v352, %v343
    %v354 = vsel %vm347, %v350, %v353
    %v355 = vsel %vm344, nan, %v354
    %v356 = vand.u32 2147483647, %v251
    %vm357 = vcmp.le.f32.partialorder %v356, 0.7853982
    %vm358 = vcmp.lt.s32.totalorder %v251, 0
    %v359 = vand.u32 %v251, 2139095040
    %v360 = vshrl.u32 %v359, 23
    %v361 = vsub.s32 %v360, 127
    %v362 = vand.u32 2147483647, %v251
    %v363 = vand.u32 %v362, 8388607
    %v364 = vor.u32 %v363, 8388608
    %v365 = vsub.s32 0, %v364
    %v366 = vadd.s32 %v361, 1
    %vm367 = vcmp.gt.s32.totalorder %v366, 0
    %v368 = vsel %vm367, %v366, 0
    %v369 = vshrl.u32 %v368, 5
    %v370 = vand.u32 %v368, 31
    %v371 = vsub.s32 32, %v370
    %v372 = vshrl.u32 683565275, %v371
    %v373 = vshll.u32 683565275, %v370
    %v374 = vshrl.u32 2475754826, %v371
    %v375 = vor.u32 %v373, %v374
    %v376 = vshll.u32 2475754826, %v370
    %v377 = vshrl.u32 2131351028, %v371
    %v378 = vor.u32 %v376, %v377
    %v379 = vshll.u32 2131351028, %v370
    %v380 = vshrl.u32 2102212464, %v371
    %v381 = vor.u32 %v379, %v380
    %v382 = vshll.u32 2102212464, %v370
    %v383 = vshrl.u32 920167782, %v371
    %v384 = vor.u32 %v382, %v383
    %v385 = vshll.u32 920167782, %v370
    %v386 = vshrl.u32 1326507024, %v371
    %v387 = vor.u32 %v385, %v386
    %vm388 = vcmp.lt.s32.totalorder %v369, 1
    %vm389 = vcmp.lt.s32.totalorder %v369, 2
    %vm390 = vcmp.lt.s32.totalorder %v369, 3
    %vm391 = vcmp.lt.s32.totalorder %v369, 4
    %v392 = vsel %vm388, %v372, %v375
    %v393 = vsel %vm391, %v381, 2102212464
    %v394 = vsel %vm390, %v378, %v393
    %v395 = vsel %vm389, %v392, %v394
    %v396 = vsel %vm388, %v375, %v378
    %v397 = vsel %vm391, %v384, 920167782
    %v398 = vsel %vm390, %v381, %v397
    %v399 = vsel %vm389, %v396, %v398
    %v400 = vsel %vm388, %v378, %v381
    %v401 = vsel %vm391, %v387, 1326507024
    %v402 = vsel %vm390, %v384, %v401
    %v403 = vsel %vm389, %v400, %v402
    %v404 = vshll.u32 %v364, 8
    %v405 = vmul.u32.u64.compose %v404, %v403
    %v406 = vextract.low.u32 %v405
    %v407 = vextract.high.u32 %v405
    %v408 = vmul.u32.u64.compose %v404, %v399
    %v409 = vextract.low.u32 %v408
    %v410 = vextract.high.u32 %v408
    %v411 = vmul.u32 %v404, %v395
    %v412 = vadd.s32 %v407, %v409
    %vm413 = vc.u32 %v407, %v409
    %v414 = vadd.s32 %v410, 1
    %v415 = vsel %vm413, %v414, %v410
    %v416 = vadd.s32 %v411, %v415
    %v417 = vadd.s32 %v416, 536870912
    %v418 = vshrl.u32 %v417, 30
    %v419 = vshll.u32 %v418, 30
    %v420 = vsub.s32 %v416, %v419
    %vm421 = vcmp.lt.s32.totalorder %v420, 0
    %v422 = vsub.s32 0, %v420
    %v423 = vsel %vm421, %v422, %v420
    %v424 = vclz %v423
    %v425 = vsub.s32 %v424, 2
    %vm426 = vcmp.gt.s32.totalorder 0, %v425
    %v427 = vsel %vm426, 0, %v425
    %v428 = vsub.s32 32, %v427
    %v429 = vshll.u32 %v420, %v427
    %v430 = vshrl.u32 %v412, %v428
    %v431 = vor.u32 %v429, %v430
    %v432 = vsub.s32 4294967266, %v427
    %v433 = vadd.s32 %v432, 127
    %v434 = vshll.u32 %v433, 23
    %v435 = vor.u32 4788187, %v434
    %v436 = vand.u32 2147483647, %v435
    %v438 = vcvt.s32.f32 %v431
    %v439 = vmul.f32 %v438, %v436
    %v440 = vxor.u32 %v439, 2147483648
    %v441 = vsel %vm358, %v440, %v439
    %v442 = vsub.s32 4, %v418
    %v443 = vsel %vm358, %v442, %v418
    %v444 = vsel %vm357, %v251, %v441
    %v445 = vsel %vm357, 0, %v443
    %v446 = vcosq.f32.pop %v444
    %v447 = vsinq.f32.pop %v444
    %vm448 = vweird.f32 %v251
    %v449 = vand.u32 %v445, 3
    %vm450 = vcmp.lt.s32.totalorder %v449, 2
    %vm451 = vcmp.eq.s32.totalorder %v449, 0
    %v452 = vxor.u32 %v447, 2147483648
    %v453 = vsel %vm451, %v446, %v452
    %vm454 = vcmp.eq.s32.totalorder %v449, 2
    %v455 = vxor.u32 %v446, 2147483648
    %v456 = vsel %vm454, %v455, %v447
    %v457 = vsel %vm450, %v453, %v456
    %v458 = vsel %vm448, nan, %v457
    %459 = vset.pattern.permute.xlu0 2
    %460 = vperm.xlu0 %459, %v25
    %v461 = vpop.permute.xlu0 %460
    %v463 = vmul.f32 %v461, %v35
    %v464 = vmul.f32 %v463, 6.2831855
    %v465 = vand.u32 2147483647, %v464
    %vm466 = vcmp.le.f32.partialorder %v465, 0.7853982
    %vm467 = vcmp.lt.s32.totalorder %v464, 0
    %v468 = vand.u32 %v464, 2139095040
    %v469 = vshrl.u32 %v468, 23
    %v470 = vsub.s32 %v469, 127
    %v471 = vand.u32 2147483647, %v464
    %v472 = vand.u32 %v471, 8388607
    %v473 = vor.u32 %v472, 8388608
    %v474 = vsub.s32 0, %v473
    %v475 = vadd.s32 %v470, 1
    %vm476 = vcmp.gt.s32.totalorder %v475, 0
    %v477 = vsel %vm476, %v475, 0
    %v478 = vshrl.u32 %v477, 5
    %v479 = vand.u32 %v477, 31
    %v480 = vsub.s32 32, %v479
    %v481 = vshrl.u32 683565275, %v480
    %v482 = vshll.u32 683565275, %v479
    %v483 = vshrl.u32 2475754826, %v480
    %v484 = vor.u32 %v482, %v483
    %v485 = vshll.u32 2475754826, %v479
    %v486 = vshrl.u32 2131351028, %v480
    %v487 = vor.u32 %v485, %v486
    %v488 = vshll.u32 2131351028, %v479
    %v489 = vshrl.u32 2102212464, %v480
    %v490 = vor.u32 %v488, %v489
    %v491 = vshll.u32 2102212464, %v479
    %v492 = vshrl.u32 920167782, %v480
    %v493 = vor.u32 %v491, %v492
    %v494 = vshll.u32 920167782, %v479
    %v495 = vshrl.u32 1326507024, %v480
    %v496 = vor.u32 %v494, %v495
    %vm497 = vcmp.lt.s32.totalorder %v478, 1
    %vm498 = vcmp.lt.s32.totalorder %v478, 2
    %vm499 = vcmp.lt.s32.totalorder %v478, 3
    %vm500 = vcmp.lt.s32.totalorder %v478, 4
    %v501 = vsel %vm497, %v481, %v484
    %v502 = vsel %vm500, %v490, 2102212464
    %v503 = vsel %vm499, %v487, %v502
    %v504 = vsel %vm498, %v501, %v503
    %v505 = vsel %vm497, %v484, %v487
    %v506 = vsel %vm500, %v493, 920167782
    %v507 = vsel %vm499, %v490, %v506
    %v508 = vsel %vm498, %v505, %v507
    %v509 = vsel %vm497, %v487, %v490
    %v510 = vsel %vm500, %v496, 1326507024
    %v511 = vsel %vm499, %v493, %v510
    %v512 = vsel %vm498, %v509, %v511
    %v513 = vshll.u32 %v473, 8
    %v514 = vmul.u32.u64.compose %v513, %v512
    %v515 = vextract.low.u32 %v514
    %v516 = vextract.high.u32 %v514
    %v517 = vmul.u32.u64.compose %v513, %v508
    %v518 = vextract.low.u32 %v517
    %v519 = vextract.high.u32 %v517
    %v520 = vmul.u32 %v513, %v504
    %v521 = vadd.s32 %v516, %v518
    %vm522 = vc.u32 %v516, %v518
    %v523 = vadd.s32 %v519, 1
    %v524 = vsel %vm522, %v523, %v519
    %v525 = vadd.s32 %v520, %v524
    %v526 = vadd.s32 %v525, 536870912
    %v527 = vshrl.u32 %v526, 30
    %v528 = vshll.u32 %v527, 30
    %v529 = vsub.s32 %v525, %v528
    %vm530 = vcmp.lt.s32.totalorder %v529, 0
    %v531 = vsub.s32 0, %v529
    %v532 = vsel %vm530, %v531, %v529
    %v533 = vclz %v532
    %v534 = vsub.s32 %v533, 2
    %vm535 = vcmp.gt.s32.totalorder 0, %v534
    %v536 = vsel %vm535, 0, %v534
    %v537 = vsub.s32 32, %v536
    %v538 = vshll.u32 %v529, %v536
    %v539 = vshrl.u32 %v521, %v537
    %v540 = vor.u32 %v538, %v539
    %v541 = vsub.s32 4294967266, %v536
    %v542 = vadd.s32 %v541, 127
    %v543 = vshll.u32 %v542, 23
    %v544 = vor.u32 4788187, %v543
    %v545 = vand.u32 2147483647, %v544
    %v547 = vcvt.s32.f32 %v540
    %v548 = vmul.f32 %v547, %v545
    %v549 = vxor.u32 %v548, 2147483648
    %v550 = vsel %vm467, %v549, %v548
    %v551 = vsub.s32 4, %v527
    %v552 = vsel %vm467, %v551, %v527
    %v553 = vsel %vm466, %v464, %v550
    %v554 = vsel %vm466, 0, %v552
    %v555 = vcosq.f32.pop %v553
    %v556 = vsinq.f32.pop %v553
    %vm557 = vweird.f32 %v464
    %v558 = vadd.s32 %v554, 3
    %v559 = vand.u32 %v558, 3
    %vm560 = vcmp.lt.s32.totalorder %v559, 2
    %vm561 = vcmp.eq.s32.totalorder %v559, 0
    %v562 = vxor.u32 %v556, 2147483648
    %v563 = vsel %vm561, %v555, %v562
    %vm564 = vcmp.eq.s32.totalorder %v559, 2
    %v565 = vxor.u32 %v555, 2147483648
    %v566 = vsel %vm564, %v565, %v556
    %v567 = vsel %vm560, %v563, %v566
    %v568 = vsel %vm557, nan, %v567
    %v569 = vand.u32 2147483647, %v464
    %vm570 = vcmp.le.f32.partialorder %v569, 0.7853982
    %vm571 = vcmp.lt.s32.totalorder %v464, 0
    %v572 = vand.u32 %v464, 2139095040
    %v573 = vshrl.u32 %v572, 23
    %v574 = vsub.s32 %v573, 127
    %v575 = vand.u32 2147483647, %v464
    %v576 = vand.u32 %v575, 8388607
    %v577 = vor.u32 %v576, 8388608
    %v578 = vsub.s32 0, %v577
    %v579 = vadd.s32 %v574, 1
    %vm580 = vcmp.gt.s32.totalorder %v579, 0
    %v581 = vsel %vm580, %v579, 0
    %v582 = vshrl.u32 %v581, 5
    %v583 = vand.u32 %v581, 31
    %v584 = vsub.s32 32, %v583
    %v585 = vshrl.u32 683565275, %v584
    %v586 = vshll.u32 683565275, %v583
    %v587 = vshrl.u32 2475754826, %v584
    %v588 = vor.u32 %v586, %v587
    %v589 = vshll.u32 2475754826, %v583
    %v590 = vshrl.u32 2131351028, %v584
    %v591 = vor.u32 %v589, %v590
    %v592 = vshll.u32 2131351028, %v583
    %v593 = vshrl.u32 2102212464, %v584
    %v594 = vor.u32 %v592, %v593
    %v595 = vshll.u32 2102212464, %v583
    %v596 = vshrl.u32 920167782, %v584
    %v597 = vor.u32 %v595, %v596
    %v598 = vshll.u32 920167782, %v583
    %v599 = vshrl.u32 1326507024, %v584
    %v600 = vor.u32 %v598, %v599
    %vm601 = vcmp.lt.s32.totalorder %v582, 1
    %vm602 = vcmp.lt.s32.totalorder %v582, 2
    %vm603 = vcmp.lt.s32.totalorder %v582, 3
    %vm604 = vcmp.lt.s32.totalorder %v582, 4
    %v605 = vsel %vm601, %v585, %v588
    %v606 = vsel %vm604, %v594, 2102212464
    %v607 = vsel %vm603, %v591, %v606
    %v608 = vsel %vm602, %v605, %v607
    %v609 = vsel %vm601, %v588, %v591
    %v610 = vsel %vm604, %v597, 920167782
    %v611 = vsel %vm603, %v594, %v610
    %v612 = vsel %vm602, %v609, %v611
    %v613 = vsel %vm601, %v591, %v594
    %v614 = vsel %vm604, %v600, 1326507024
    %v615 = vsel %vm603, %v597, %v614
    %v616 = vsel %vm602, %v613, %v615
    %v617 = vshll.u32 %v577, 8
    %v618 = vmul.u32.u64.compose %v617, %v616
    %v619 = vextract.low.u32 %v618
    %v620 = vextract.high.u32 %v618
    %v621 = vmul.u32.u64.compose %v617, %v612
    %v622 = vextract.low.u32 %v621
    %v623 = vextract.high.u32 %v621
    %v624 = vmul.u32 %v617, %v608
    %v625 = vadd.s32 %v620, %v622
    %vm626 = vc.u32 %v620, %v622
    %v627 = vadd.s32 %v623, 1
    %v628 = vsel %vm626, %v627, %v623
    %v629 = vadd.s32 %v624, %v628
    %v630 = vadd.s32 %v629, 536870912
    %v631 = vshrl.u32 %v630, 30
    %v632 = vshll.u32 %v631, 30
    %v633 = vsub.s32 %v629, %v632
    %vm634 = vcmp.lt.s32.totalorder %v633, 0
    %v635 = vsub.s32 0, %v633
    %v636 = vsel %vm634, %v635, %v633
    %v637 = vclz %v636
    %v638 = vsub.s32 %v637, 2
    %vm639 = vcmp.gt.s32.totalorder 0, %v638
    %v640 = vsel %vm639, 0, %v638
    %v641 = vsub.s32 32, %v640
    %v642 = vshll.u32 %v633, %v640
    %v643 = vshrl.u32 %v625, %v641
    %v644 = vor.u32 %v642, %v643
    %v645 = vsub.s32 4294967266, %v640
    %v646 = vadd.s32 %v645, 127
    %v647 = vshll.u32 %v646, 23
    %v648 = vor.u32 4788187, %v647
    %v649 = vand.u32 2147483647, %v648
    %v651 = vcvt.s32.f32 %v644
    %v652 = vmul.f32 %v651, %v649
    %v653 = vxor.u32 %v652, 2147483648
    %v654 = vsel %vm571, %v653, %v652
    %v655 = vsub.s32 4, %v631
    %v656 = vsel %vm571, %v655, %v631
    %v657 = vsel %vm570, %v464, %v654
    %v658 = vsel %vm570, 0, %v656
    %v659 = vcosq.f32.pop %v657
    %v660 = vsinq.f32.pop %v657
    %vm661 = vweird.f32 %v464
    %v662 = vand.u32 %v658, 3
    %vm663 = vcmp.lt.s32.totalorder %v662, 2
    %vm664 = vcmp.eq.s32.totalorder %v662, 0
    %v665 = vxor.u32 %v660, 2147483648
    %v666 = vsel %vm664, %v659, %v665
    %vm667 = vcmp.eq.s32.totalorder %v662, 2
    %v668 = vxor.u32 %v659, 2147483648
    %v669 = vsel %vm667, %v668, %v660
    %v670 = vsel %vm663, %v666, %v669
    %v671 = vsel %vm661, nan, %v670
    %672 = vset.pattern.permute.xlu0 3
    %673 = vperm.xlu0 %672, %v25
    %v674 = vpop.permute.xlu0 %673
    %v676 = vmul.f32 %v674, %v35
    %v677 = vmul.f32 %v676, 6.2831855
    %v678 = vand.u32 2147483647, %v677
    %vm679 = vcmp.le.f32.partialorder %v678, 0.7853982
    %vm680 = vcmp.lt.s32.totalorder %v677, 0
    %v681 = vand.u32 %v677, 2139095040
    %v682 = vshrl.u32 %v681, 23
    %v683 = vsub.s32 %v682, 127
    %v684 = vand.u32 2147483647, %v677
    %v685 = vand.u32 %v684, 8388607
    %v686 = vor.u32 %v685, 8388608
    %v687 = vsub.s32 0, %v686
    %v688 = vadd.s32 %v683, 1
    %vm689 = vcmp.gt.s32.totalorder %v688, 0
    %v690 = vsel %vm689, %v688, 0
    %v691 = vshrl.u32 %v690, 5
    %v692 = vand.u32 %v690, 31
    %v693 = vsub.s32 32, %v692
    %v694 = vshrl.u32 683565275, %v693
    %v695 = vshll.u32 683565275, %v692
    %v696 = vshrl.u32 2475754826, %v693
    %v697 = vor.u32 %v695, %v696
    %v698 = vshll.u32 2475754826, %v692
    %v699 = vshrl.u32 2131351028, %v693
    %v700 = vor.u32 %v698, %v699
    %v701 = vshll.u32 2131351028, %v692
    %v702 = vshrl.u32 2102212464, %v693
    %v703 = vor.u32 %v701, %v702
    %v704 = vshll.u32 2102212464, %v692
    %v705 = vshrl.u32 920167782, %v693
    %v706 = vor.u32 %v704, %v705
    %v707 = vshll.u32 920167782, %v692
    %v708 = vshrl.u32 1326507024, %v693
    %v709 = vor.u32 %v707, %v708
    %vm710 = vcmp.lt.s32.totalorder %v691, 1
    %vm711 = vcmp.lt.s32.totalorder %v691, 2
    %vm712 = vcmp.lt.s32.totalorder %v691, 3
    %vm713 = vcmp.lt.s32.totalorder %v691, 4
    %v714 = vsel %vm710, %v694, %v697
    %v715 = vsel %vm713, %v703, 2102212464
    %v716 = vsel %vm712, %v700, %v715
    %v717 = vsel %vm711, %v714, %v716
    %v718 = vsel %vm710, %v697, %v700
    %v719 = vsel %vm713, %v706, 920167782
    %v720 = vsel %vm712, %v703, %v719
    %v721 = vsel %vm711, %v718, %v720
    %v722 = vsel %vm710, %v700, %v703
    %v723 = vsel %vm713, %v709, 1326507024
    %v724 = vsel %vm712, %v706, %v723
    %v725 = vsel %vm711, %v722, %v724
    %v726 = vshll.u32 %v686, 8
    %v727 = vmul.u32.u64.compose %v726, %v725
    %v728 = vextract.low.u32 %v727
    %v729 = vextract.high.u32 %v727
    %v730 = vmul.u32.u64.compose %v726, %v721
    %v731 = vextract.low.u32 %v730
    %v732 = vextract.high.u32 %v730
    %v733 = vmul.u32 %v726, %v717
    %v734 = vadd.s32 %v729, %v731
    %vm735 = vc.u32 %v729, %v731
    %v736 = vadd.s32 %v732, 1
    %v737 = vsel %vm735, %v736, %v732
    %v738 = vadd.s32 %v733, %v737
    %v739 = vadd.s32 %v738, 536870912
    %v740 = vshrl.u32 %v739, 30
    %v741 = vshll.u32 %v740, 30
    %v742 = vsub.s32 %v738, %v741
    %vm743 = vcmp.lt.s32.totalorder %v742, 0
    %v744 = vsub.s32 0, %v742
    %v745 = vsel %vm743, %v744, %v742
    %v746 = vclz %v745
    %v747 = vsub.s32 %v746, 2
    %vm748 = vcmp.gt.s32.totalorder 0, %v747
    %v749 = vsel %vm748, 0, %v747
    %v750 = vsub.s32 32, %v749
    %v751 = vshll.u32 %v742, %v749
    %v752 = vshrl.u32 %v734, %v750
    %v753 = vor.u32 %v751, %v752
    %v754 = vsub.s32 4294967266, %v749
    %v755 = vadd.s32 %v754, 127
    %v756 = vshll.u32 %v755, 23
    %v757 = vor.u32 4788187, %v756
    %v758 = vand.u32 2147483647, %v757
    %v760 = vcvt.s32.f32 %v753
    %v761 = vmul.f32 %v760, %v758
    %v762 = vxor.u32 %v761, 2147483648
    %v763 = vsel %vm680, %v762, %v761
    %v764 = vsub.s32 4, %v740
    %v765 = vsel %vm680, %v764, %v740
    %v766 = vsel %vm679, %v677, %v763
    %v767 = vsel %vm679, 0, %v765
    %v768 = vcosq.f32.pop %v766
    %v769 = vsinq.f32.pop %v766
    %vm770 = vweird.f32 %v677
    %v771 = vadd.s32 %v767, 3
    %v772 = vand.u32 %v771, 3
    %vm773 = vcmp.lt.s32.totalorder %v772, 2
    %vm774 = vcmp.eq.s32.totalorder %v772, 0
    %v775 = vxor.u32 %v769, 2147483648
    %v776 = vsel %vm774, %v768, %v775
    %vm777 = vcmp.eq.s32.totalorder %v772, 2
    %v778 = vxor.u32 %v768, 2147483648
    %v779 = vsel %vm777, %v778, %v769
    %v780 = vsel %vm773, %v776, %v779
    %v781 = vsel %vm770, nan, %v780
    %v782 = vand.u32 2147483647, %v677
    %vm783 = vcmp.le.f32.partialorder %v782, 0.7853982
    %vm784 = vcmp.lt.s32.totalorder %v677, 0
    %v785 = vand.u32 %v677, 2139095040
    %v786 = vshrl.u32 %v785, 23
    %v787 = vsub.s32 %v786, 127
    %v788 = vand.u32 2147483647, %v677
    %v789 = vand.u32 %v788, 8388607
    %v790 = vor.u32 %v789, 8388608
    %v791 = vsub.s32 0, %v790
    %v792 = vadd.s32 %v787, 1
    %vm793 = vcmp.gt.s32.totalorder %v792, 0
    %v794 = vsel %vm793, %v792, 0
    %v795 = vshrl.u32 %v794, 5
    %v796 = vand.u32 %v794, 31
    %v797 = vsub.s32 32, %v796
    %v798 = vshrl.u32 683565275, %v797
    %v799 = vshll.u32 683565275, %v796
    %v800 = vshrl.u32 2475754826, %v797
    %v801 = vor.u32 %v799, %v800
    %v802 = vshll.u32 2475754826, %v796
    %v803 = vshrl.u32 2131351028, %v797
    %v804 = vor.u32 %v802, %v803
    %v805 = vshll.u32 2131351028, %v796
    %v806 = vshrl.u32 2102212464, %v797
    %v807 = vor.u32 %v805, %v806
    %v808 = vshll.u32 2102212464, %v796
    %v809 = vshrl.u32 920167782, %v797
    %v810 = vor.u32 %v808, %v809
    %v811 = vshll.u32 920167782, %v796
    %v812 = vshrl.u32 1326507024, %v797
    %v813 = vor.u32 %v811, %v812
    %vm814 = vcmp.lt.s32.totalorder %v795, 1
    %vm815 = vcmp.lt.s32.totalorder %v795, 2
    %vm816 = vcmp.lt.s32.totalorder %v795, 3
    %vm817 = vcmp.lt.s32.totalorder %v795, 4
    %v818 = vsel %vm814, %v798, %v801
    %v819 = vsel %vm817, %v807, 2102212464
    %v820 = vsel %vm816, %v804, %v819
    %v821 = vsel %vm815, %v818, %v820
    %v822 = vsel %vm814, %v801, %v804
    %v823 = vsel %vm817, %v810, 920167782
    %v824 = vsel %vm816, %v807, %v823
    %v825 = vsel %vm815, %v822, %v824
    %v826 = vsel %vm814, %v804, %v807
    %v827 = vsel %vm817, %v813, 1326507024
    %v828 = vsel %vm816, %v810, %v827
    %v829 = vsel %vm815, %v826, %v828
    %v830 = vshll.u32 %v790, 8
    %v831 = vmul.u32.u64.compose %v830, %v829
    %v832 = vextract.low.u32 %v831
    %v833 = vextract.high.u32 %v831
    %v834 = vmul.u32.u64.compose %v830, %v825
    %v835 = vextract.low.u32 %v834
    %v836 = vextract.high.u32 %v834
    %v837 = vmul.u32 %v830, %v821
    %v838 = vadd.s32 %v833, %v835
    %vm839 = vc.u32 %v833, %v835
    %v840 = vadd.s32 %v836, 1
    %v841 = vsel %vm839, %v840, %v836
    %v842 = vadd.s32 %v837, %v841
    %v843 = vadd.s32 %v842, 536870912
    %v844 = vshrl.u32 %v843, 30
    %v845 = vshll.u32 %v844, 30
    %v846 = vsub.s32 %v842, %v845
    %vm847 = vcmp.lt.s32.totalorder %v846, 0
    %v848 = vsub.s32 0, %v846
    %v849 = vsel %vm847, %v848, %v846
    %v850 = vclz %v849
    %v851 = vsub.s32 %v850, 2
    %vm852 = vcmp.gt.s32.totalorder 0, %v851
    %v853 = vsel %vm852, 0, %v851
    %v854 = vsub.s32 32, %v853
    %v855 = vshll.u32 %v846, %v853
    %v856 = vshrl.u32 %v838, %v854
    %v857 = vor.u32 %v855, %v856
    %v858 = vsub.s32 4294967266, %v853
    %v859 = vadd.s32 %v858, 127
    %v860 = vshll.u32 %v859, 23
    %v861 = vor.u32 4788187, %v860
    %v862 = vand.u32 2147483647, %v861
    %v864 = vcvt.s32.f32 %v857
    %v865 = vmul.f32 %v864, %v862
    %v866 = vxor.u32 %v865, 2147483648
    %v867 = vsel %vm784, %v866, %v865
    %v868 = vsub.s32 4, %v844
    %v869 = vsel %vm784, %v868, %v844
    %v870 = vsel %vm783, %v677, %v867
    %v871 = vsel %vm783, 0, %v869
    %v872 = vcosq.f32.pop %v870
    %v873 = vsinq.f32.pop %v870
    %vm874 = vweird.f32 %v677
    %v875 = vand.u32 %v871, 3
    %vm876 = vcmp.lt.s32.totalorder %v875, 2
    %vm877 = vcmp.eq.s32.totalorder %v875, 0
    %v878 = vxor.u32 %v873, 2147483648
    %v879 = vsel %vm877, %v872, %v878
    %vm880 = vcmp.eq.s32.totalorder %v875, 2
    %v881 = vxor.u32 %v872, 2147483648
    %v882 = vsel %vm880, %v881, %v873
    %v883 = vsel %vm876, %v879, %v882
    %v884 = vsel %vm874, nan, %v883
    %886 = vrot.lane.b32.xlu0 %v245, 16
    %v887 = vpop.permute.xlu0 %886
    %890 = vrot.lane.b32.xlu0 %v355, 32
    %v891 = vpop.permute.xlu0 %890
    %894 = vrot.lane.b32.xlu0 %v458, 48
    %v895 = vpop.permute.xlu0 %894
    %898 = vrot.lane.b32.xlu0 %v568, 64
    %v899 = vpop.permute.xlu0 %898
    %902 = vrot.lane.b32.xlu0 %v671, 80
    %v903 = vpop.permute.xlu0 %902
    %906 = vrot.lane.b32.xlu0 %v781, 96
    %v907 = vpop.permute.xlu0 %906
    %910 = vrot.lane.b32.xlu0 %v884, 112
    %v911 = vpop.permute.xlu0 %910
    %vm913 = vcmask 130048
    %v914 = vsel %vm913, %v142, %v887
    %vm915 = vcmask 261120
    %v916 = vsel %vm915, %v914, %v891
    %vm917 = vcmask 392192
    %v918 = vsel %vm917, %v916, %v895
    %vm919 = vcmask 523264
    %v920 = vsel %vm919, %v918, %v899
    %vm921 = vcmask 654336
    %v922 = vsel %vm921, %v920, %v903
    %vm923 = vcmask 785408
    %v924 = vsel %vm923, %v922, %v907
    %vm925 = vcmask 916480
    %v926 = vsel %vm925, %v924, %v911
    %927 = vst [vmem:[#allocation5] sm:$0x3] %v926
    // Predicated region
    $region14: #{tpu_custom_call.1} parent=1 // pred_check
      _
    $region15: #{tpu_custom_call.1} parent=1 // pred_check_branch
      %929 = sbr.rel (0) target = $region17
    $region16: #{tpu_custom_call.1} parent=1 // pred_region
      %s931 = ssub.s32 32, 32
      %932 = vsyncadd [#allocation4], %s931
      %s934 = sshll.u32 [#allocation5], 4
      %s935 = int_to_ptr.vmem [resolvable:$true] %s934
      %937 = dma.vmem_to_hbm [thread:$0]  %s935, 32, %s2, [#allocation4]
    $region17: #{tpu_custom_call.1} parent=1 // pred_fallthru
      _
    // Predicated region
    $region18: #{tpu_custom_call.1} parent=1 // pred_check
      _
    $region19: #{tpu_custom_call.1} parent=1 // pred_check_branch
      %939 = sbr.rel (0) target = $region21
    $region20: #{tpu_custom_call.1} parent=1 // pred_region
      %940 = dma.done [#allocation4], 32
    $region21: #{tpu_custom_call.1} parent=1 // pred_fallthru
      _
    %941 = vsyncpa [#allocation3], 1
    %942 = vsyncpa [#allocation4], 1

</llo_original>
